<compile_context>
chip_gen: v7x
topology: tpu7x:2x2x1
jax: 0.10.0
libtpu: 0.0.40
codegen_flags: <defaults>
</compile_context>

<pallas_src>
import jax
import jax.numpy as jnp
from jax.experimental import pallas as pl
from jax.experimental.pallas import tpu as pltpu


def _pos_enc_kernel(x_ref, pos_ref, o_ref):
    # One (tm, D) row-tile: out = x + positional embedding for these nodes.
    o_ref[...] = x_ref[...] + pos_ref[...]


def _choose_row_tile(n: int) -> int:
    """Largest power-of-two row tile (multiple of 8 sublanes) that divides n."""
    for tm in (1024, 512, 256, 128, 64, 32, 16, 8):
        if n % tm == 0:
            return tm
    return n  # fall back to a single full-array block (full-dim exception)


def graph_positional_encoding(x, pos_embedding_table, edge_index=None):
    """Forward of GraphPositionalEncoding.

    x:                   (N, D) node features
    pos_embedding_table: (num_nodes, D) nn.Embedding weight, num_nodes >= N
    edge_index:          unused by the reference forward (kept for API parity)
    """
    n, d = x.shape
    assert pos_embedding_table.shape[0] >= n, "embedding table too small"
    assert pos_embedding_table.shape[1] == d

    # arange(N) gather == leading-row slice of the table.
    pos = jax.lax.slice_in_dim(pos_embedding_table, 0, n, axis=0).astype(x.dtype)

    tm = _choose_row_tile(n)
    grid = (pl.cdiv(n, tm),)

    blk = pl.BlockSpec((tm, d), lambda i: (i, 0))

    return pl.pallas_call(
        _pos_enc_kernel,
        grid=grid,
        in_specs=[blk, blk],
        out_specs=blk,
        out_shape=jax.ShapeDtypeStruct((n, d), x.dtype),
        compiler_params=pltpu.CompilerParams(
            # Row tiles are fully independent -> shard across TCs on v7x.
            dimension_semantics=("parallel",),
        ),
    )(x, pos)


if __name__ == "__main__":
    # Small shapes consistent with the module: N nodes, lane-dense D=128,
    # embedding table with more slots than active nodes (num_nodes > N).
    num_active_nodes = 64        # x.size(0)
    table_num_nodes = 96         # nn.Embedding(num_nodes, ...)
    embedding_dim = 128
    num_edges = 256

    key = jax.random.PRNGKey(0)
    kx, kt, ke1, ke2 = jax.random.split(key, 4)

    x = jax.random.normal(kx, (num_active_nodes, embedding_dim), jnp.float32)
    pos_table = 0.02 * jax.random.normal(
        kt, (table_num_nodes, embedding_dim), jnp.float32)

    src = jax.random.randint(ke1, (num_edges,), 0, num_active_nodes)
    dst = jax.random.randint(ke2, (num_edges,), 0, num_active_nodes)
    edge_index = jnp.stack([src, dst], axis=0).astype(jnp.int32)  # unused by forward

    out = graph_positional_encoding(x, pos_table, edge_index)
    out = jax.block_until_ready(out)

    # Reference: x + pos_embedding(arange(N))
    ref = x + pos_table[:num_active_nodes]
    assert out.shape == (num_active_nodes, embedding_dim)
    assert bool(jnp.allclose(out, ref, atol=1e-6, rtol=1e-6))
    print("KERNEL_OK")
</pallas_src>

<mosaic_0001>
module attributes {stable_mosaic.version = 11 : i64} {
  func.func @_pos_enc_kernel(%arg0: i32, %arg1: memref<64x128xf32, #tpu.memory_space<vmem>>, %arg2: memref<64x128xf32, #tpu.memory_space<vmem>>, %arg3: memref<64x128xf32, #tpu.memory_space<vmem>>) attributes {dimension_semantics = [#tpu.dimension_semantics<parallel>], iteration_bounds = array<i64: 1>, scalar_prefetch = 0 : i64, scratch_operands = 0 : i64, tpu.core_type = #tpu.core_type<tc>, window_params = [{transform_indices = @transform_0, window_bounds = array<i64: 64, 128>}, {transform_indices = @transform_1, window_bounds = array<i64: 64, 128>}, {transform_indices = @transform_2, window_bounds = array<i64: 64, 128>}]} {
    %c0 = arith.constant 0 : index
    %c0_0 = arith.constant 0 : index
    %0 = vector.load %arg1[%c0, %c0_0] : memref<64x128xf32, #tpu.memory_space<vmem>>, vector<64x128xf32>
    %c0_1 = arith.constant 0 : index
    %c0_2 = arith.constant 0 : index
    %1 = vector.load %arg2[%c0_1, %c0_2] : memref<64x128xf32, #tpu.memory_space<vmem>>, vector<64x128xf32>
    %2 = arith.addf %0, %1 : vector<64x128xf32>
    %c0_3 = arith.constant 0 : index
    %c0_4 = arith.constant 0 : index
    %3 = vector.load %arg3[%c0_3, %c0_4] : memref<64x128xf32, #tpu.memory_space<vmem>>, vector<64x128xf32>
    tpu.vector_store %arg3[%c0_3, %c0_4], %2 {strides = array<i32>} : memref<64x128xf32, #tpu.memory_space<vmem>>, vector<64x128xf32>,
    return
  }
  func.func @transform_0(%arg0: i32) -> (i32, i32) {
    %c0_i32 = arith.constant 0 : i32
    %c0_i32_0 = arith.constant 0 : i32
    return %arg0, %c0_i32 : i32, i32
  }
  func.func @transform_1(%arg0: i32) -> (i32, i32) {
    %c0_i32 = arith.constant 0 : i32
    %c0_i32_0 = arith.constant 0 : i32
    return %arg0, %c0_i32 : i32, i32
  }
  func.func @transform_2(%arg0: i32) -> (i32, i32) {
    %c0_i32 = arith.constant 0 : i32
    %c0_i32_0 = arith.constant 0 : i32
    return %arg0, %c0_i32 : i32, i32
  }
}

</mosaic_0001>

<llo_original>
// kernel: tpu_custom_call.1
$region0: #{tpu_custom_call.1}
  #allocation0 [shape = 'u32[]', space=smem, size = 0x4, offset = 0x4, fixed_abs, tag = 'smem constant byte address 0x4 - core index']
  #allocation1 [shape = 'u32[144,128]{1,0:T(1,128)}', space=vmem, size = 0x12000, scoped, tag = 'internal scratch']
  %s0 = inlined_call_operand.hbm [shape: f32[64,128], index: 0, kind: input, shape index: {}]
  %s1 = inlined_call_operand.hbm [shape: f32[64,128], index: 1, kind: input, shape index: {}]
  %s2 = inlined_call_operand.hbm [shape: f32[64,128], index: 2, kind: output, shape index: {}]
  %s3 = sld [smem:[#allocation0]]
  $region26: #{tpu_custom_call.1} parent=0
    _
  %s5 = ssub.s32 1, %s3
  %s6 = scalar_select 0, %s5, %s3
  $region1: #{tpu_custom_call.1} parent=0
    #allocation2 [shape = 'u8[32768]{0}', space=vmem, size = 0x8000, scoped, tag = 'input window, operand 0, single buffered']
    #allocation3 [shape = 's32[1]{0}', space=sflag, size = 0x4, scoped, tag = 'scoped memory for tpu_custom_call.1']
    #allocation4 [shape = 's32[1]{0}', space=sflag, size = 0x4, scoped, tag = 'scoped memory for tpu_custom_call.1']
    #allocation5 [shape = 'u8[32768]{0}', space=vmem, size = 0x8000, scoped, tag = 'input window, operand 1, single buffered']
    #allocation6 [shape = 's32[1]{0}', space=sflag, size = 0x4, scoped, tag = 'scoped memory for tpu_custom_call.1']
    #allocation7 [shape = 'u8[32768]{0}', space=vmem, size = 0x8000, scoped, tag = 'output window, operand 0, single buffered']
    %7 = vsyncpa [#allocation3], 0
    %8 = vsyncpa [#allocation6], 0
    %9 = vsyncpa [#allocation4], 0
    // Predicated region
    $region2: #{tpu_custom_call.1} parent=1 // pred_check
      _
    $region3: #{tpu_custom_call.1} parent=1 // pred_check_branch
      %11 = sbr.rel (0) target = $region5
    $region4: #{tpu_custom_call.1} parent=1 // pred_region
      %s13 = ssub.s32 1024, 1024
      %14 = vsyncadd [#allocation3], %s13
      %s15 = sshll.u32 [#allocation2], 4
      %s16 = int_to_ptr.vmem [resolvable:$true] %s15
      %21 = dma.hbm_to_vmem [thread:$0]  %s0, 1024, %s16, [#allocation3], 128, 128, 8
    $region5: #{tpu_custom_call.1} parent=1 // pred_fallthru
      _
    // Predicated region
    $region6: #{tpu_custom_call.1} parent=1 // pred_check
      _
    $region7: #{tpu_custom_call.1} parent=1 // pred_check_branch
      %23 = sbr.rel (0) target = $region9
    $region8: #{tpu_custom_call.1} parent=1 // pred_region
      %s25 = ssub.s32 1024, 1024
      %26 = vsyncadd [#allocation6], %s25
      %s27 = sshll.u32 [#allocation5], 4
      %s28 = int_to_ptr.vmem [resolvable:$true] %s27
      %33 = dma.hbm_to_vmem [thread:$0]  %s1, 1024, %s28, [#allocation6], 128, 128, 8
    $region9: #{tpu_custom_call.1} parent=1 // pred_fallthru
      _
    // Predicated region
    $region10: #{tpu_custom_call.1} parent=1 // pred_check
      _
    $region11: #{tpu_custom_call.1} parent=1 // pred_check_branch
      %35 = sbr.rel (0) target = $region13
    $region12: #{tpu_custom_call.1} parent=1 // pred_region
      %36 = dma.done [#allocation3], 1024
    $region13: #{tpu_custom_call.1} parent=1 // pred_fallthru
      _
    // Predicated region
    $region14: #{tpu_custom_call.1} parent=1 // pred_check
      _
    $region15: #{tpu_custom_call.1} parent=1 // pred_check_branch
      %38 = sbr.rel (0) target = $region17
    $region16: #{tpu_custom_call.1} parent=1 // pred_region
      %39 = dma.done [#allocation6], 1024
    $region17: #{tpu_custom_call.1} parent=1 // pred_fallthru
      _
    %v40 = vld [vmem:[#allocation2] sm:$0xff]
    %v41 = vld [vmem:[#allocation2 + $0x8] sm:$0xff]
    %v42 = vld [vmem:[#allocation2 + $0x10] sm:$0xff]
    %v43 = vld [vmem:[#allocation2 + $0x18] sm:$0xff]
    %v44 = vld [vmem:[#allocation2 + $0x20] sm:$0xff]
    %v45 = vld [vmem:[#allocation2 + $0x28] sm:$0xff]
    %v46 = vld [vmem:[#allocation2 + $0x30] sm:$0xff]
    %v47 = vld [vmem:[#allocation2 + $0x38] sm:$0xff]
    %v48 = vld [vmem:[#allocation5] sm:$0xff]
    %v49 = vld [vmem:[#allocation5 + $0x8] sm:$0xff]
    %v50 = vld [vmem:[#allocation5 + $0x10] sm:$0xff]
    %v51 = vld [vmem:[#allocation5 + $0x18] sm:$0xff]
    %v52 = vld [vmem:[#allocation5 + $0x20] sm:$0xff]
    %v53 = vld [vmem:[#allocation5 + $0x28] sm:$0xff]
    %v54 = vld [vmem:[#allocation5 + $0x30] sm:$0xff]
    %v55 = vld [vmem:[#allocation5 + $0x38] sm:$0xff]
    %v56 = vadd.f32 %v40, %v48
    %v57 = vadd.f32 %v41, %v49
    %v58 = vadd.f32 %v42, %v50
    %v59 = vadd.f32 %v43, %v51
    %v60 = vadd.f32 %v44, %v52
    %v61 = vadd.f32 %v45, %v53
    %v62 = vadd.f32 %v46, %v54
    %v63 = vadd.f32 %v47, %v55
    %64 = vst [vmem:[#allocation7] sm:$0xff] %v56
    %65 = vst [vmem:[#allocation7 + $0x8] sm:$0xff] %v57
    %66 = vst [vmem:[#allocation7 + $0x10] sm:$0xff] %v58
    %67 = vst [vmem:[#allocation7 + $0x18] sm:$0xff] %v59
    %68 = vst [vmem:[#allocation7 + $0x20] sm:$0xff] %v60
    %69 = vst [vmem:[#allocation7 + $0x28] sm:$0xff] %v61
    %70 = vst [vmem:[#allocation7 + $0x30] sm:$0xff] %v62
    %71 = vst [vmem:[#allocation7 + $0x38] sm:$0xff] %v63
    // Predicated region
    $region18: #{tpu_custom_call.1} parent=1 // pred_check
      _
    $region19: #{tpu_custom_call.1} parent=1 // pred_check_branch
      %73 = sbr.rel (0) target = $region21
    $region20: #{tpu_custom_call.1} parent=1 // pred_region
      %s75 = ssub.s32 1024, 1024
      %76 = vsyncadd [#allocation4], %s75
      %s77 = sshll.u32 [#allocation7], 4
      %s78 = int_to_ptr.vmem [resolvable:$true] %s77
      %83 = dma.vmem_to_hbm [thread:$0]  %s78, 1024, %s2, [#allocation4], 128, 128, 8
    $region21: #{tpu_custom_call.1} parent=1 // pred_fallthru
      _
    // Predicated region
    $region22: #{tpu_custom_call.1} parent=1 // pred_check
      _
    $region23: #{tpu_custom_call.1} parent=1 // pred_check_branch
      %85 = sbr.rel (0) target = $region25
    $region24: #{tpu_custom_call.1} parent=1 // pred_region
      %86 = dma.done [#allocation4], 1024
    $region25: #{tpu_custom_call.1} parent=1 // pred_fallthru
      _
    %87 = vsyncpa [#allocation3], 1
    %88 = vsyncpa [#allocation6], 1
    %89 = vsyncpa [#allocation4], 1

</llo_original>
